<compile_context>
chip_gen: v7x
topology: tpu7x:2x2x1
jax: 0.10.0
libtpu: 0.0.40
codegen_flags: <defaults>
</compile_context>

<pallas_src>
import functools

import jax
import jax.numpy as jnp
from jax.experimental import pallas as pl
from jax.experimental.pallas import tpu as pltpu

_NEG_BIG = -1e30


def _cyclic_hsum(p, H, W):
    """Segmented sum over H, broadcast back over H, on the flattened last axis.

    out[..., h*W + w] = sum_{h'} p[..., h'*W + w]   (exact f32 adds).
    """
    if H == 1:
        return p
    orig_shape = p.shape
    HW = H * W
    p2 = p.reshape(-1, HW)                      # 2-D slab for the XLU roll ops
    if HW % 128 == 0:
        if H & (H - 1) == 0:                    # power-of-two H: log2(H) doublings
            acc = p2
            shift = W
            while shift * 2 <= HW:
                acc = acc + pltpu.roll(acc, shift=shift, axis=1)
                shift *= 2
        else:                                   # general H: H-1 rolls of the original
            acc = p2
            for h in range(1, H):
                acc = acc + pltpu.roll(p2, shift=h * W, axis=1)
        return acc.reshape(orig_shape)
    # Lane-unaligned fallback (not hit by the test shapes): reshape + reduce.
    q = p2.reshape(-1, H, W)
    q = jnp.broadcast_to(jnp.sum(q, axis=-2, keepdims=True), q.shape)
    return q.reshape(orig_shape)


def _pooling_maps_kernel(x_ref, *rest, n_out, n_slices, H, W, use_mask):
    if use_mask:
        mask_ref, o_ref = rest
    else:
        (o_ref,) = rest

    bt = x_ref.shape[0]
    HW = H * W

    # Channel groups, read straight from the VMEM block (lane-dense HW last dim).
    a = x_ref[:, 0:n_out, :].astype(jnp.float32)                                  # (bt, n_out, HW)
    logits = x_ref[:, n_out:n_out + n_slices, :].astype(jnp.float32)              # (bt, n_slices, HW)
    cvals = x_ref[:, n_out + n_slices:n_out + 2 * n_slices, :].astype(jnp.float32)

    if use_mask:
        m = mask_ref[...].astype(jnp.float32)                                     # (bt, 1, HW)
        # No jnp.log: mask to -BIG for the max, multiply the exp by m.
        # Identical to exp(l + log m) for m > 0; exact for binary masks.
        # All-zero mask => denom 0 => NaN output, like the torch reference.
        logits = jnp.where(m > 0.0, logits, _NEG_BIG)

    # Flattened-spatial softmax, vectorized over the whole (bt, n_slices) slab.
    mx = jnp.max(logits, axis=-1, keepdims=True)                                  # (bt, n_slices, 1)
    e = jnp.exp(logits - mx)                                                      # (bt, n_slices, HW)
    if use_mask:
        e = e * m
    denom = jnp.sum(e, axis=-1, keepdims=True)                                    # (bt, n_slices, 1)
    w = e * pl.reciprocal(denom, approx=False)                                    # softmax weights

    acc = jnp.zeros((bt, n_out, HW), jnp.float32)
    for s in range(n_slices):                        # n_slices is small; unrolled
        p = a * w[:, s:s + 1, :]                     # (bt, n_out, HW)
        hs = _cyclic_hsum(p, H, W)                   # H-sum broadcast over H (roll tree)
        acc = acc + hs * cvals[:, s:s + 1, :]
    o_ref[...] = acc.astype(o_ref.dtype)


def _vmem_capacity_bytes():
    try:
        cap = int(pltpu.get_tpu_info().vmem_capacity_bytes)
        if cap > 0:
            return cap
    except Exception:
        pass
    return 64 << 20   # conservative default (v7x per-TensorCore VMEM)


def _choose_batch_tile(batch, per_elem_hbm_bytes, per_elem_live_bytes, vmem_cap):
    """Largest exact-divisor batch tile hitting a multi-MiB block target."""
    # Memory-bound op: per-grid-step overhead ~0.35us, so aim for big blocks,
    # bounded by double-buffered I/O blocks + live f32 intermediates in VMEM.
    per_elem = 2 * per_elem_hbm_bytes + per_elem_live_bytes
    target = max(512 << 10, min(8 << 20, vmem_cap // 8))
    size_cap = max(1, int(target) // max(per_elem, 1))
    # Keep several grid steps so the auto-pipeline can prefetch block i+1 and
    # (on v7x) both TensorCores get work.
    if batch >= 16:
        steps_cap = batch // 8
    elif batch >= 2:
        steps_cap = batch // 2
    else:
        steps_cap = 1
    cap = max(1, min(batch, size_cap, steps_cap))
    bt = 1
    for cand in range(1, cap + 1):       # exact tiling, no partial blocks
        if batch % cand == 0:
            bt = cand
    return bt


def pooling_maps(x, mask=None, *, n_slices):
    """Pallas TPU implementation of PoolingMaps.forward for n_dim == 2 (NCHW)."""
    # TODO(synk): the n_dim == 1 variant (B, n_in, L) is not wired up here.
    B, n_in, H, W = x.shape
    n_out = n_in - 2 * n_slices
    assert n_out > 0
    HW = H * W
    use_mask = mask is not None
    itemsize = jnp.dtype(x.dtype).itemsize

    # Lane-dense views: free (contiguous) reshape outside the kernel.
    x_flat = x.reshape(B, n_in, HW)

    per_elem_bytes = (n_in + n_out) * HW * itemsize + (HW * 4 if use_mask else 0)
    per_elem_live = (n_in + 2 * n_out + 2 * n_slices) * HW * 4 + (HW * 4 if use_mask else 0)

    vmem_cap = _vmem_capacity_bytes()
    bt = _choose_batch_tile(B, per_elem_bytes, per_elem_live, vmem_cap)
    grid = (B // bt,)

    in_specs = [pl.BlockSpec((bt, n_in, HW), lambda i: (i, 0, 0))]
    args = [x_flat]
    if use_mask:
        mask_flat = mask.reshape(B, 1, HW).astype(jnp.float32)
        in_specs.append(pl.BlockSpec((bt, 1, HW), lambda i: (i, 0, 0)))
        args.append(mask_flat)

    # Generation-aware VMEM budget: double-buffered blocks + live slabs + slack.
    block_bytes = 2 * bt * per_elem_bytes + bt * per_elem_live
    vmem_limit = int(min((vmem_cap * 3) // 4,
                         max(32 << 20, block_bytes + (4 << 20))))

    log2h = max(1, (H - 1).bit_length())
    flops_per_elem = n_slices * (4 * HW + n_out * HW * (3 + log2h))
    cost = pl.CostEstimate(
        flops=int(B * flops_per_elem),
        transcendentals=int(B * n_slices * HW),
        bytes_accessed=int(B * per_elem_bytes),
    )

    kernel = functools.partial(
        _pooling_maps_kernel, n_out=n_out, n_slices=n_slices,
        H=H, W=W, use_mask=use_mask)

    out_flat = pl.pallas_call(
        kernel,
        out_shape=jax.ShapeDtypeStruct((B, n_out, HW), x.dtype),
        grid_spec=pltpu.PrefetchScalarGridSpec(
            num_scalar_prefetch=0,
            grid=grid,
            in_specs=in_specs,
            out_specs=pl.BlockSpec((bt, n_out, HW), lambda i: (i, 0, 0)),
        ),
        compiler_params=pltpu.CompilerParams(
            dimension_semantics=("parallel",),
            vmem_limit_bytes=vmem_limit,
        ),
        cost_estimate=cost,
    )(*args)

    return out_flat.reshape(B, n_out, H, W)


def pooling_maps_ref(x, mask, n_slices):
    """Pure-JAX transcription of the PyTorch reference, for verification."""
    n_in = x.shape[1]
    n_out = n_in - 2 * n_slices
    a = x[:, :n_out]
    b = x[:, n_out:n_in - n_slices]
    c = x[:, n_in - n_slices:]
    if mask is not None:
        b = b + jnp.log(mask[:, None].astype(jnp.float32))
    bf = b.reshape(b.shape[0], b.shape[1], -1)
    bf = jax.nn.softmax(bf, axis=2)
    b = bf.reshape(b.shape)
    tmp = a[:, None] * b[:, :, None]           # (B, n_slices, n_out, H, W)
    tmp = jnp.sum(tmp, axis=3, keepdims=True)  # sum over H, keepdim
    tmp = tmp * c[:, :, None]
    return jnp.sum(tmp, axis=1)                # (B, n_out, H, W)


if __name__ == "__main__":
    # n_dim=2, n_in=4, n_slices=1 -> n_out=2
    B, n_in, H, W = 2, 4, 16, 16
    n_slices = 1

    key = jax.random.PRNGKey(0)
    kx, km = jax.random.split(key)
    x = jax.random.normal(kx, (B, n_in, H, W), dtype=jnp.float32)

    # Binary spatial mask (as in the torch code: mask.float()), guaranteed non-empty.
    mask = jax.random.bernoulli(km, p=0.7, shape=(B, H, W)).astype(jnp.float32)
    mask = mask.at[:, 0, 0].set(1.0)

    out_masked = jax.block_until_ready(pooling_maps(x, mask, n_slices=n_slices))
    out_nomask = jax.block_until_ready(pooling_maps(x, None, n_slices=n_slices))

    ref_masked = pooling_maps_ref(x, mask, n_slices)
    ref_nomask = pooling_maps_ref(x, None, n_slices)

    assert out_masked.shape == (B, n_in - 2 * n_slices, H, W)
    assert jnp.allclose(out_masked, ref_masked, rtol=1e-5, atol=1e-5), "masked mismatch"
    assert jnp.allclose(out_nomask, ref_nomask, rtol=1e-5, atol=1e-5), "no-mask mismatch"

    print("KERNEL_OK")
</pallas_src>

<mosaic_0001>
module attributes {stable_mosaic.version = 11 : i64} {
  func.func @_pooling_maps_kernel(%arg0: i32, %arg1: memref<1x4x256xf32, #tpu.memory_space<vmem>>, %arg2: memref<1x1x256xf32, #tpu.memory_space<vmem>>, %arg3: memref<1x2x256xf32, #tpu.memory_space<vmem>>) attributes {dimension_semantics = [#tpu.dimension_semantics<parallel>], iteration_bounds = array<i64: 2>, scalar_prefetch = 0 : i64, scratch_operands = 0 : i64, tpu.core_type = #tpu.core_type<tc>, window_params = [{transform_indices = @transform_0, window_bounds = array<i64: 1, 4, 256>}, {transform_indices = @transform_1, window_bounds = array<i64: 1, 1, 256>}, {transform_indices = @transform_2, window_bounds = array<i64: 1, 2, 256>}]} {
    %c0 = arith.constant 0 : index
    %c0_0 = arith.constant 0 : index
    %c0_1 = arith.constant 0 : index
    %0 = vector.load %arg1[%c0, %c0_0, %c0_1] : memref<1x4x256xf32, #tpu.memory_space<vmem>>, vector<1x2x256xf32>
    %c0_2 = arith.constant 0 : index
    %c2 = arith.constant 2 : index
    %c0_3 = arith.constant 0 : index
    %1 = vector.load %arg1[%c0_2, %c2, %c0_3] : memref<1x4x256xf32, #tpu.memory_space<vmem>>, vector<1x1x256xf32>
    %c0_4 = arith.constant 0 : index
    %c3 = arith.constant 3 : index
    %c0_5 = arith.constant 0 : index
    %2 = vector.load %arg1[%c0_4, %c3, %c0_5] : memref<1x4x256xf32, #tpu.memory_space<vmem>>, vector<1x1x256xf32>
    %c0_6 = arith.constant 0 : index
    %c0_7 = arith.constant 0 : index
    %c0_8 = arith.constant 0 : index
    %3 = vector.load %arg2[%c0_6, %c0_7, %c0_8] : memref<1x1x256xf32, #tpu.memory_space<vmem>>, vector<1x1x256xf32>
    %cst = arith.constant 0.000000e+00 : f32
    %4 = vector.broadcast %cst : f32 to vector<1x1x256xf32>
    %5 = arith.cmpf ogt, %3, %4 : vector<1x1x256xf32>
    %cst_9 = arith.constant -1.000000e+30 : f32
    %6 = vector.broadcast %cst_9 : f32 to vector<1x1x256xf32>
    %7 = arith.select %5, %1, %6 : vector<1x1x256xi1>, vector<1x1x256xf32>
    %cst_10 = arith.constant dense<0xFF800000> : vector<1x1xf32>
    %8 = vector.multi_reduction <maximumf>, %7, %cst_10 [2] : vector<1x1x256xf32> to vector<1x1xf32>
    %9 = vector.shape_cast %8 : vector<1x1xf32> to vector<1x1x1xf32>
    %10 = vector.broadcast %9 : vector<1x1x1xf32> to vector<1x1x256xf32>
    %11 = arith.subf %7, %10 : vector<1x1x256xf32>
    %12 = math.exp %11 : vector<1x1x256xf32>
    %13 = arith.mulf %12, %3 : vector<1x1x256xf32>
    %cst_11 = arith.constant dense<0.000000e+00> : vector<1x1xf32>
    %14 = vector.multi_reduction <add>, %13, %cst_11 [2] : vector<1x1x256xf32> to vector<1x1xf32>
    %15 = vector.shape_cast %14 : vector<1x1xf32> to vector<1x1x1xf32>
    %16 = tpu.reciprocal %15 : vector<1x1x1xf32> -> vector<1x1x1xf32>
    %17 = vector.broadcast %16 : vector<1x1x1xf32> to vector<1x1x256xf32>
    %18 = arith.mulf %13, %17 : vector<1x1x256xf32>
    %cst_12 = arith.constant 0.000000e+00 : f32
    %19 = vector.broadcast %cst_12 : f32 to vector<1x2x256xf32>
    %20 = vector.broadcast %18 : vector<1x1x256xf32> to vector<1x2x256xf32>
    %21 = arith.mulf %0, %20 : vector<1x2x256xf32>
    %22 = vector.shape_cast %21 : vector<1x2x256xf32> to vector<2x256xf32>
    %c16_i32 = arith.constant 16 : i32
    %23 = tpu.dynamic_rotate %22 by %c16_i32 dim 1 : vector<2x256xf32>, i32 -> vector<2x256xf32>
    %24 = arith.addf %22, %23 : vector<2x256xf32>
    %c32_i32 = arith.constant 32 : i32
    %25 = tpu.dynamic_rotate %24 by %c32_i32 dim 1 : vector<2x256xf32>, i32 -> vector<2x256xf32>
    %26 = arith.addf %24, %25 : vector<2x256xf32>
    %c64_i32 = arith.constant 64 : i32
    %27 = tpu.dynamic_rotate %26 by %c64_i32 dim 1 : vector<2x256xf32>, i32 -> vector<2x256xf32>
    %28 = arith.addf %26, %27 : vector<2x256xf32>
    %c128_i32 = arith.constant 128 : i32
    %29 = tpu.dynamic_rotate %28 by %c128_i32 dim 1 : vector<2x256xf32>, i32 -> vector<2x256xf32>
    %30 = arith.addf %28, %29 : vector<2x256xf32>
    %31 = vector.shape_cast %30 : vector<2x256xf32> to vector<1x2x256xf32>
    %32 = vector.broadcast %2 : vector<1x1x256xf32> to vector<1x2x256xf32>
    %33 = arith.mulf %31, %32 : vector<1x2x256xf32>
    %34 = arith.addf %19, %33 : vector<1x2x256xf32>
    %c0_13 = arith.constant 0 : index
    %c0_14 = arith.constant 0 : index
    %c0_15 = arith.constant 0 : index
    %35 = vector.load %arg3[%c0_13, %c0_14, %c0_15] : memref<1x2x256xf32, #tpu.memory_space<vmem>>, vector<1x2x256xf32>
    tpu.vector_store %arg3[%c0_13, %c0_14, %c0_15], %34 {strides = array<i32>} : memref<1x2x256xf32, #tpu.memory_space<vmem>>, vector<1x2x256xf32>,
    return
  }
  func.func @transform_0(%arg0: i32) -> (i32, i32, i32) {
    %c0_i32 = arith.constant 0 : i32
    %c0_i32_0 = arith.constant 0 : i32
    %c0_i32_1 = arith.constant 0 : i32
    return %arg0, %c0_i32, %c0_i32_0 : i32, i32, i32
  }
  func.func @transform_1(%arg0: i32) -> (i32, i32, i32) {
    %c0_i32 = arith.constant 0 : i32
    %c0_i32_0 = arith.constant 0 : i32
    %c0_i32_1 = arith.constant 0 : i32
    return %arg0, %c0_i32, %c0_i32_0 : i32, i32, i32
  }
  func.func @transform_2(%arg0: i32) -> (i32, i32, i32) {
    %c0_i32 = arith.constant 0 : i32
    %c0_i32_0 = arith.constant 0 : i32
    %c0_i32_1 = arith.constant 0 : i32
    return %arg0, %c0_i32, %c0_i32_0 : i32, i32, i32
  }
}

</mosaic_0001>

<llo_original>
// kernel: tpu_custom_call.1
$region0: #{tpu_custom_call.1}
  #allocation0 [shape = 'u32[]', space=smem, size = 0x4, offset = 0x4, fixed_abs, tag = 'smem constant byte address 0x4 - core index']
  #allocation1 [shape = 'u32[144,128]{1,0:T(1,128)}', space=vmem, size = 0x12000, scoped, tag = 'internal scratch']
  %s0 = inlined_call_operand.hbm [shape: f32[2,4,256], index: 0, kind: input, shape index: {}]
  %s1 = inlined_call_operand.hbm [shape: f32[2,1,256], index: 1, kind: input, shape index: {}]
  %s2 = inlined_call_operand.hbm [shape: f32[2,2,256], index: 2, kind: output, shape index: {}]
  %s3 = sld [smem:[#allocation0]]
  $region49: #{tpu_custom_call.1} parent=0
    _
  %s5 = ssub.s32 1, %s3
  %s6 = scalar_select 0, %s5, %s3
  $region1: #{tpu_custom_call.1} parent=0
    #allocation2 [shape = 'u8[8192]{0}', space=vmem, size = 0x2000, scoped, tag = 'input window, operand 0']
    #allocation3 [shape = 's32[2]{0}', space=sflag, size = 0x8, scoped, tag = 'scoped memory for tpu_custom_call.1']
    #allocation4 [shape = 's32[2]{0}', space=sflag, size = 0x8, scoped, tag = 'scoped memory for tpu_custom_call.1']
    #allocation5 [shape = 'u8[2048]{0}', space=vmem, size = 0x800, scoped, tag = 'input window, operand 1']
    #allocation6 [shape = 's32[2]{0}', space=sflag, size = 0x8, scoped, tag = 'scoped memory for tpu_custom_call.1']
    #allocation7 [shape = 'u8[4096]{0}', space=vmem, size = 0x1000, scoped, tag = 'output window, operand 0']
    %7 = vsyncpa [#allocation3], 0
    %s8 = scalar_lea.sflag [#allocation3], 1
    %9 = vsyncpa %s8, 0
    %10 = vsyncpa [#allocation6], 0
    %s11 = scalar_lea.sflag [#allocation6], 1
    %12 = vsyncpa %s11, 0
    %13 = vsyncpa [#allocation4], 0
    %s14 = scalar_lea.sflag [#allocation4], 1
    %15 = vsyncpa %s14, 0
    loop: start=0, step=1, limit=4
    $region2: #{tpu_custom_call.1} parent=1 // loop_pre_header
      _
    $region3: #{tpu_custom_call.1} parent=1 // loop_header
      %s17 = sphi 0, %s21
      %p18 = scmp.ge.s32.totalorder %s17, 4
      %s27 = sphi 0, %s29
      %s30 = sphi 0, %s27
      %s31 = sphi 0, %s30
      %s47 = sphi 0, %s31
      %s53 = sphi 0, %s55
      %s56 = sphi 0, %s53
      %s57 = sphi 0, %s56
      %s73 = sphi 0, %s57
      %s79 = sphi 0, %s81
      %s82 = sphi 0, %s79
      %s83 = sphi 0, %s82
      %s99 = sphi 0, %s83
    $region4: #{tpu_custom_call.1} parent=1 // loop_header_branch
      %20 = sbr.rel (%p18) target = $region8
    $region5: #{tpu_custom_call.1} parent=1 // loop_body
      %s22 = ssub.s32 %s17, 1
      %s23 = ssub.s32 %s17, 2
      %s24 = sadd.s32 %s17, 1
      %s25 = ssub.s32 %s17, %s24
      %p26 = scmp.eq.s32.totalorder %s25, 0
      %s28 = sadd.s32 %s27, 1
      %s29 = scalar_select %p26, %s27, %s28
      %p32 = pneg %p26
      %p33 = scmp.eq.s32.totalorder %s17, 1
      %p34 = por %p32, %p33
      %p35 = scmp.ne.s32.totalorder %s27, %s30
      %p36 = scmp.eq.s32.totalorder %s17, 0
      %p37 = por %p35, %p36
      %p38 = scmp.ne.s32.totalorder %s27, %s30
      %p39 = scmp.eq.s32.totalorder %s22, 1
      %p40 = por %p38, %p39
      %p41 = scmp.ne.s32.totalorder %s30, %s31
      %p42 = scmp.eq.s32.totalorder %s22, 0
      %p43 = por %p41, %p42
      %p44 = scmp.ne.s32.totalorder %s30, %s31
      %p45 = scmp.eq.s32.totalorder %s23, 1
      %p46 = por %p44, %p45
      %p48 = scmp.ne.s32.totalorder %s31, %s47
      %p49 = scmp.eq.s32.totalorder %s23, 0
      %p50 = por %p48, %p49
      %s51 = ssub.s32 %s17, %s24
      %p52 = scmp.eq.s32.totalorder %s51, 0
      %s54 = sadd.s32 %s53, 1
      %s55 = scalar_select %p52, %s53, %s54
      %p58 = pneg %p52
      %p59 = scmp.eq.s32.totalorder %s17, 1
      %p60 = por %p58, %p59
      %p61 = scmp.ne.s32.totalorder %s53, %s56
      %p62 = scmp.eq.s32.totalorder %s17, 0
      %p63 = por %p61, %p62
      %p64 = scmp.ne.s32.totalorder %s53, %s56
      %p65 = scmp.eq.s32.totalorder %s22, 1
      %p66 = por %p64, %p65
      %p67 = scmp.ne.s32.totalorder %s56, %s57
      %p68 = scmp.eq.s32.totalorder %s22, 0
      %p69 = por %p67, %p68
      %p70 = scmp.ne.s32.totalorder %s56, %s57
      %p71 = scmp.eq.s32.totalorder %s23, 1
      %p72 = por %p70, %p71
      %p74 = scmp.ne.s32.totalorder %s57, %s73
      %p75 = scmp.eq.s32.totalorder %s23, 0
      %p76 = por %p74, %p75
      %s77 = ssub.s32 %s17, %s24
      %p78 = scmp.eq.s32.totalorder %s77, 0
      %s80 = sadd.s32 %s79, 1
      %s81 = scalar_select %p78, %s79, %s80
      %p84 = pneg %p78
      %p85 = scmp.eq.s32.totalorder %s17, 1
      %p86 = por %p84, %p85
      %p87 = scmp.ne.s32.totalorder %s79, %s82
      %p88 = scmp.eq.s32.totalorder %s17, 0
      %p89 = por %p87, %p88
      %p90 = scmp.ne.s32.totalorder %s79, %s82
      %p91 = scmp.eq.s32.totalorder %s22, 1
      %p92 = por %p90, %p91
      %p93 = scmp.ne.s32.totalorder %s82, %s83
      %p94 = scmp.eq.s32.totalorder %s22, 0
      %p95 = por %p93, %p94
      %p96 = scmp.ne.s32.totalorder %s82, %s83
      %p97 = scmp.eq.s32.totalorder %s23, 1
      %p98 = por %p96, %p97
      %p100 = scmp.ne.s32.totalorder %s83, %s99
      %p101 = scmp.eq.s32.totalorder %s23, 0
      %p102 = por %p100, %p101
      %p103 = scmp.le.s32.totalorder 1, %s17
      %p104 = scmp.lt.s32.totalorder %s17, 3
      %p105 = pnand %p103, %p104
      %p106 = pneg %p105
      // Predicated region
      $region9: #{tpu_custom_call.1} parent=5 // pred_check
        _
      $region10: #{tpu_custom_call.1} parent=5 // pred_check_branch
        %108 = sbr.rel (%p105) target = $region12
      $region11: #{tpu_custom_call.1} parent=5 // pred_region
        %s109 = ssub.s32 %s17, 1
      $region12: #{tpu_custom_call.1} parent=5 // pred_fallthru
        _
      %p110 = scmp.lt.s32.totalorder %s17, 2
      // Predicated region
      $region13: #{tpu_custom_call.1} parent=5 // pred_check
        %p111 = pneg %p110
      $region14: #{tpu_custom_call.1} parent=5 // pred_check_branch
        %113 = sbr.rel (%p111) target = $region16
      $region15: #{tpu_custom_call.1} parent=5 // pred_region
        // Predicated region
        $region17: #{tpu_custom_call.1} parent=15 // pred_check
          %p114 = pneg %p37
        $region18: #{tpu_custom_call.1} parent=15 // pred_check_branch
          %116 = sbr.rel (%p114) target = $region20
        $region19: #{tpu_custom_call.1} parent=15 // pred_region
          %s117 = sand.u32 %s27, 1
          %s118 = scalar_lea.sflag [#allocation3], %s117
          %s119 = sand.u32 %s27, 1
          %s120 = smul.addr %s119, 8
          %s121 = scalar_lea.vmem [#allocation2], %s120
          %s123 = ssub.s32 128, 128
          %124 = vsyncadd %s118, %s123
          %s125 = smul.addr %s17, 2
          %s126 = smul.addr %s125, 64
          %s127 = scalar_lea.hbm %s0, %s126
          %s129 = sshll.u32 %s121, 4
          %s130 = int_to_ptr.vmem [resolvable:$true] %s129
          %132 = dma.hbm_to_vmem [thread:$0]  %s127, 128, %s130, %s118
        $region20: #{tpu_custom_call.1} parent=15 // pred_fallthru
          _
        // Predicated region
        $region21: #{tpu_custom_call.1} parent=15 // pred_check
          %p133 = pneg %p63
        $region22: #{tpu_custom_call.1} parent=15 // pred_check_branch
          %135 = sbr.rel (%p133) target = $region24
        $region23: #{tpu_custom_call.1} parent=15 // pred_region
          %s136 = sand.u32 %s53, 1
          %s137 = scalar_lea.sflag [#allocation6], %s136
          %s138 = sand.u32 %s53, 1
          %s139 = smul.addr %s138, 2
          %s140 = scalar_lea.vmem [#allocation5], %s139
          %s142 = ssub.s32 32, 32
          %143 = vsyncadd %s137, %s142
          %s144 = smul.addr %s17, 2
          %s145 = smul.addr %s144, 16
          %s146 = scalar_lea.hbm %s1, %s145
          %s148 = sshll.u32 %s140, 4
          %s149 = int_to_ptr.vmem [resolvable:$true] %s148
          %151 = dma.hbm_to_vmem [thread:$0]  %s146, 32, %s149, %s137
        $region24: #{tpu_custom_call.1} parent=15 // pred_fallthru
          _
      $region16: #{tpu_custom_call.1} parent=5 // pred_fallthru
        _
      %p152 = scmp.le.s32.totalorder 1, %s17
      %p153 = scmp.lt.s32.totalorder %s17, 3
      %p154 = pnand %p152, %p153
      %p155 = pneg %p154
      // Predicated region
      $region25: #{tpu_custom_call.1} parent=5 // pred_check
        _
      $region26: #{tpu_custom_call.1} parent=5 // pred_check_branch
        %157 = sbr.rel (%p154) target = $region28
      $region27: #{tpu_custom_call.1} parent=5 // pred_region
        %s158 = ssub.s32 %s17, 1
        %s159 = sand.u32 %s30, 1
        %s160 = scalar_lea.sflag [#allocation3], %s159
        %s161 = sand.u32 %s30, 1
        %s162 = smul.addr %s161, 8
        %s163 = scalar_lea.vmem [#allocation2], %s162
        // Predicated region
        $region29: #{tpu_custom_call.1} parent=27 // pred_check
          %p164 = pneg %p43
        $region30: #{tpu_custom_call.1} parent=27 // pred_check_branch
          %166 = sbr.rel (%p164) target = $region32
        $region31: #{tpu_custom_call.1} parent=27 // pred_region
          %167 = dma.done %s160, 128
        $region32: #{tpu_custom_call.1} parent=27 // pred_fallthru
          _
        %s168 = sand.u32 %s56, 1
        %s169 = scalar_lea.sflag [#allocation6], %s168
        %s170 = sand.u32 %s56, 1
        %s171 = smul.addr %s170, 2
        %s172 = scalar_lea.vmem [#allocation5], %s171
        // Predicated region
        $region33: #{tpu_custom_call.1} parent=27 // pred_check
          %p173 = pneg %p69
        $region34: #{tpu_custom_call.1} parent=27 // pred_check_branch
          %175 = sbr.rel (%p173) target = $region36
        $region35: #{tpu_custom_call.1} parent=27 // pred_region
          %176 = dma.done %s169, 32
        $region36: #{tpu_custom_call.1} parent=27 // pred_fallthru
          _
        %s177 = sand.u32 %s30, 1
        %s178 = scalar_lea.sflag [#allocation3], %s177
        %s179 = sand.u32 %s30, 1
        %s180 = smul.addr %s179, 8
        %s181 = scalar_lea.vmem [#allocation2], %s180
        %p182 = pneg %p43
        %p183 = pneg %p40
        %s184 = sand.u32 %s56, 1
        %s185 = scalar_lea.sflag [#allocation6], %s184
        %s186 = sand.u32 %s56, 1
        %s187 = smul.addr %s186, 2
        %s188 = scalar_lea.vmem [#allocation5], %s187
        %p189 = pneg %p69
        %p190 = pneg %p66
        %p191 = pneg %p95
        %p192 = pneg %p92
        %s193 = sand.u32 %s82, 1
        %s194 = scalar_lea.sflag [#allocation4], %s193
        %s195 = sand.u32 %s82, 1
        %s196 = smul.addr %s195, 4
        %s197 = scalar_lea.vmem [#allocation7], %s196
        %v198 = vld [vmem:[%s163] sm:$0x33]
        %s199 = scalar_lea.vmem %s163, 2 [#allocation2]
        %v200 = vld [vmem:[%s199] ss:$4 sm:$0x3]
        %s201 = scalar_lea.vmem %s163, 3 [#allocation2]
        %v202 = vld [vmem:[%s201] ss:$4 sm:$0x3]
        %v203 = vld [vmem:[%s172] sm:$0x3]
        %vm204 = vcmp.gt.f32.partialorder %v203, 0.0
        %v205 = vsel %vm204, %v200, -1e+30
        %v207 = vlaneseq
        %v208 = vshrl.u32 %v207, 7
        %v209 = vsub.s32 0, %v208
        %v210 = vrot.slane %v205, %v209
        %v211 = vlaneseq
        %v212 = vshrl.u32 %v211, 7
        %v213 = vsub.s32 1, %v212
        %v214 = vrot.slane %v205, %v213
        %vm217 = vcmask 1040384
        %v218 = vsel %vm217, %v210, -inf
        %v219 = vsel %vm217, %v214, -inf
        %v220 = vmax.f32 %v218, %v219
        %221 = vmax.xlane.f32.xlu0 %v220
        %v222 = vpop.xlane.xlu0 %221
        %v224 = vlaneseq
        %v225 = vshrl.u32 %v224, 7
        %v226 = vsub.s32 0, %v225
        %v227 = vrot.slane %v222, %v226
        %v229 = vsub.f32 %v205, %v227
        %v230 = vmul.f32 %v229, 1.442695
        %v231 = vpow.pop %v230
        %v232 = vmul.f32 %v231, %v203
        %v234 = vlaneseq
        %v235 = vshrl.u32 %v234, 7
        %v236 = vsub.s32 0, %v235
        %v237 = vrot.slane %v232, %v236
        %v238 = vlaneseq
        %v239 = vshrl.u32 %v238, 7
        %v240 = vsub.s32 1, %v239
        %v241 = vrot.slane %v232, %v240
        %v244 = vsel %vm217, %v237, 0.0
        %v245 = vsel %vm217, %v241, 0.0
        %v246 = vadd.f32 %v244, %v245
        %247 = vadd.xlane.f32.xlu0 %v246
        %v248 = vpop.xlane.xlu0 %247
        %v249 = vrcp.pop %v248
        %v251 = vlaneseq
        %v252 = vshrl.u32 %v251, 7
        %v253 = vsub.s32 0, %v252
        %v254 = vrot.slane %v249, %v253
        %v256 = vmul.f32 %v232, %v254
        %v258 = vlaneseq
        %v259 = vshrl.u32 %v258, 7
        %v260 = vsub.s32 0, %v259
        %v261 = vrot.slane %v256, %v260
        %v262 = vlaneseq
        %v263 = vshrl.u32 %v262, 7
        %v264 = vsub.s32 1, %v263
        %v265 = vrot.slane %v256, %v264
        %v266 = vcombine.low %v261, %v265
        %v268 = vmul.f32 %v198, %v266
        %v270 = vcombine.high %v268, %v268
        %272 = vrot.lane.b32.xlu0 %v268, 16
        %v273 = vpop.permute.xlu0 %272
        %274 = vrot.lane.b32.xlu0 %v270, 16
        %v275 = vpop.permute.xlu0 %274
        %v276 = vlaneseq
        %v277 = vand.u32 %v276, 127
        %vm278 = vcmp.lt.s32.totalorder %v277, 16
        %v279 = vsel %vm278, %v273, %v275
        %v280 = vsel %vm278, %v275, %v273
        %v283 = vcombine.low %v280, %v279
        %v285 = vadd.f32 %v268, %v283
        %v287 = vcombine.high %v285, %v285
        %289 = vrot.lane.b32.xlu0 %v285, 32
        %v290 = vpop.permute.xlu0 %289
        %291 = vrot.lane.b32.xlu0 %v287, 32
        %v292 = vpop.permute.xlu0 %291
        %vm293 = vcmp.lt.s32.totalorder %v277, 32
        %v294 = vsel %vm293, %v290, %v292
        %v295 = vsel %vm293, %v292, %v290
        %v298 = vcombine.low %v295, %v294
        %v300 = vadd.f32 %v285, %v298
        %v302 = vcombine.high %v300, %v300
        %304 = vrot.lane.b32.xlu0 %v300, 64
        %v305 = vpop.permute.xlu0 %304
        %306 = vrot.lane.b32.xlu0 %v302, 64
        %v307 = vpop.permute.xlu0 %306
        %vm308 = vcmp.lt.s32.totalorder %v277, 64
        %v309 = vsel %vm308, %v305, %v307
        %v310 = vsel %vm308, %v307, %v305
        %v313 = vcombine.low %v310, %v309
        %v315 = vadd.f32 %v300, %v313
        %v317 = vcombine.high %v315, %v315
        %v318 = vcombine.low %v317, %v315
        %v320 = vadd.f32 %v315, %v318
        %v322 = vlaneseq
        %v323 = vshrl.u32 %v322, 7
        %v324 = vsub.s32 0, %v323
        %v325 = vrot.slane %v202, %v324
        %v326 = vlaneseq
        %v327 = vshrl.u32 %v326, 7
        %v328 = vsub.s32 1, %v327
        %v329 = vrot.slane %v202, %v328
        %v330 = vcombine.low %v325, %v329
        %v332 = vmul.f32 %v320, %v330
        %v333 = vadd.f32 %v332, 0.0
        %v336 = vunpack.c.l.s4 1983009808
        %v337 = vunpack.c.0.s8 %v336
        %v338 = vlaneseq
        %v339 = vshrl.u32 %v338, 7
        %v340 = vsub.s32 %v337, %v339
        %v341 = vrot.slane %v333, %v340
        %343 = vst [vmem:[%s197] sm:$0xf] %v341
        %s344 = sand.u32 %s82, 1
        %s345 = scalar_lea.sflag [#allocation4], %s344
        %s346 = sand.u32 %s82, 1
        %s347 = smul.addr %s346, 4
        %s348 = scalar_lea.vmem [#allocation7], %s347
        // Predicated region
        $region37: #{tpu_custom_call.1} parent=27 // pred_check
          %p349 = pneg %p92
        $region38: #{tpu_custom_call.1} parent=27 // pred_check_branch
          %351 = sbr.rel (%p349) target = $region40
        $region39: #{tpu_custom_call.1} parent=27 // pred_region
          %s353 = ssub.s32 64, 64
          %354 = vsyncadd %s345, %s353
          %s355 = smul.addr %s22, 2
          %s356 = smul.addr %s355, 32
          %s357 = scalar_lea.hbm %s2, %s356
          %s359 = sshll.u32 %s348, 4
          %s360 = int_to_ptr.vmem [resolvable:$true] %s359
          %362 = dma.vmem_to_hbm [thread:$0]  %s360, 64, %s357, %s345
        $region40: #{tpu_custom_call.1} parent=27 // pred_fallthru
          _
      $region28: #{tpu_custom_call.1} parent=5 // pred_fallthru
        _
      %p363 = scmp.le.s32.totalorder 2, %s17
      // Predicated region
      $region41: #{tpu_custom_call.1} parent=5 // pred_check
        %p364 = pneg %p363
      $region42: #{tpu_custom_call.1} parent=5 // pred_check_branch
        %366 = sbr.rel (%p364) target = $region44
      $region43: #{tpu_custom_call.1} parent=5 // pred_region
        %s367 = ssub.s32 %s17, 2
        // Predicated region
        $region45: #{tpu_custom_call.1} parent=43 // pred_check
          %p368 = pneg %p98
        $region46: #{tpu_custom_call.1} parent=43 // pred_check_branch
          %370 = sbr.rel (%p368) target = $region48
        $region47: #{tpu_custom_call.1} parent=43 // pred_region
          %s371 = sand.u32 %s83, 1
          %s372 = scalar_lea.sflag [#allocation4], %s371
          %s373 = sand.u32 %s83, 1
          %s374 = smul.addr %s373, 4
          %s375 = scalar_lea.vmem [#allocation7], %s374
          %376 = dma.done %s372, 64
        $region48: #{tpu_custom_call.1} parent=43 // pred_fallthru
          _
      $region44: #{tpu_custom_call.1} parent=5 // pred_fallthru
        _
    $region6: #{tpu_custom_call.1} parent=1 // loop_footer
      %s21 = sadd.s32 1, %s17
    $region7: #{tpu_custom_call.1} parent=1 // loop_footer_branch
      %16 = sbr.rel target = $region3
    $region8: #{tpu_custom_call.1} parent=1 // loop_exit
      _
    %377 = vsyncpa [#allocation3], 1
    %s378 = scalar_lea.sflag [#allocation3], 1
    %379 = vsyncpa %s378, 1
    %380 = vsyncpa [#allocation6], 1
    %s381 = scalar_lea.sflag [#allocation6], 1
    %382 = vsyncpa %s381, 1
    %383 = vsyncpa [#allocation4], 1
    %s384 = scalar_lea.sflag [#allocation4], 1
    %385 = vsyncpa %s384, 1

</llo_original>
